<compile_context>
chip_gen: v7x
topology: tpu7x:2x2x1
jax: 0.10.0
libtpu: 0.0.40
codegen_flags: <defaults>
</compile_context>

<pallas_src>
import functools

import jax
import jax.numpy as jnp
from jax.experimental import pallas as pl
from jax.experimental.pallas import tpu as pltpu

LANE = 128


def _round_up(x, m):
    return (x + m - 1) // m * m


# ----------------------------------------------------------------------------
# Kernel factory
# ----------------------------------------------------------------------------
def _make_kernel(K, dilation, pad, Nb, Lt, Cin, Cout, Cout_p, cdt):
    def kernel(x_ref, w1_ref, b1_ref, w2_ref, b2_ref, o_ref, xtail_ref, htail_ref):
        # x_ref : (Nb, Lt, Cin)           f32   current time tile (NLC, unpadded)
        # w1_ref: (K, Cin, 2*Cout_p)      bf16  conv1 taps | residual cols (last tap)
        # b1_ref: (1, 2*Cout_p)           f32   [b1 | bd]
        # w2_ref: (K, Cout_p, Cout_p)     bf16  conv2 taps
        # b2_ref: (1, Cout_p)             f32
        # o_ref : (Nb, Lt, Cout)          f32   unpadded output tile
        # xtail_ref / htail_ref: (Nb, pad, Cin/Cout_p) bf16 causal-halo carries
        t = pl.program_id(1)

        # First time tile of a batch block: causal context is zeros.
        @pl.when(t == 0)
        def _():
            xtail_ref[...] = jnp.zeros_like(xtail_ref)
            htail_ref[...] = jnp.zeros_like(htail_ref)

        # Load + cast; build the causally padded input from the carried tail.
        x = x_ref[...].astype(cdt)                              # (Nb, Lt, Cin)
        xc = jnp.concatenate([xtail_ref[...], x], axis=1)       # (Nb, Lt+pad, Cin)

        # conv1 (+ fused residual): per-tap accumulating MXU matmuls.
        # Columns [0:Cout_p] are conv1 tap k; columns [Cout_p:2*Cout_p] hold the
        # 1x1 downsample weight on the last tap only (its input slice is the
        # un-shifted current tile), zeros elsewhere.
        acc = jnp.dot(xc[:, 0:Lt, :].reshape(Nb * Lt, Cin), w1_ref[0],
                      preferred_element_type=jnp.float32)
        for k in range(1, K):
            lhs = xc[:, k * dilation:k * dilation + Lt, :].reshape(Nb * Lt, Cin)
            acc = acc + jnp.dot(lhs, w1_ref[k],
                                preferred_element_type=jnp.float32)
        acc = acc + b1_ref[...]                                  # (Nb*Lt, 2*Cout_p)
        h1 = jnp.maximum(acc[:, :Cout_p], 0.0)                   # chomp1 + relu1
        res = acc[:, Cout_p:]                                    # residual (no relu)
        # dropout1 / dropout2: identity at inference time.

        # conv2 on h1, causal pad carried from the previous tile's h1 tail.
        h1b = h1.astype(cdt).reshape(Nb, Lt, Cout_p)
        hc = jnp.concatenate([htail_ref[...], h1b], axis=1)      # (Nb, Lt+pad, Cout_p)
        acc2 = jnp.dot(hc[:, 0:Lt, :].reshape(Nb * Lt, Cout_p), w2_ref[0],
                       preferred_element_type=jnp.float32)
        for k in range(1, K):
            lhs = hc[:, k * dilation:k * dilation + Lt, :].reshape(Nb * Lt, Cout_p)
            acc2 = acc2 + jnp.dot(lhs, w2_ref[k],
                                  preferred_element_type=jnp.float32)
        out = jnp.maximum(acc2 + b2_ref[...], 0.0)               # chomp2 + relu2

        # Final relu(out + res); store only the real channels (no padded f32
        # columns ever reach HBM).
        y = jnp.maximum(out + res, 0.0).reshape(Nb, Lt, Cout_p)
        o_ref[...] = y[:, :, :Cout].astype(o_ref.dtype)

        # Carry the last `pad` rows for the next time tile (Lt >= pad).
        xtail_ref[...] = xc[:, Lt:, :]
        htail_ref[...] = hc[:, Lt:, :]

    return kernel


# ----------------------------------------------------------------------------
# Generation-aware resource management
# ----------------------------------------------------------------------------
def _vmem_budget_bytes():
    """(per-step working-set budget, Mosaic vmem_limit_bytes)."""
    try:
        kind = jax.devices()[0].device_kind.lower()
    except Exception:  # pragma: no cover - defensive
        kind = ""
    if "v7" in kind:                     # 64 MiB physical VMEM per TensorCore
        return 20 << 20, 48 << 20
    # v5e / v6e: 128 MiB physical (32/16 MiB scoped default -> raise it).
    return 48 << 20, 100 << 20


def _pick_tiles(N, L, pad, K, Cin, Cout, Cout_p, budget, nb=None, lt=None):
    """Choose (Nb, Lt).  Lt >= pad (carry needs it), multiple of 8; Nb divides N
    and is capped at N//2 so v7x's 2 TensorCores both get parallel grid steps."""
    lt_min = max(8, _round_up(max(pad, 1), 8))

    def cost(nb_, lt_):
        in_buf = 2 * nb_ * lt_ * Cin * 4                       # dbl-buffered f32 in
        out_buf = 2 * nb_ * lt_ * Cout * 4                      # dbl-buffered f32 out
        w_buf = (2 * 2 * K * Cin * 2 * Cout_p                   # dbl-buffered bf16 w1aug
                 + 2 * 2 * K * Cout_p * Cout_p                  # dbl-buffered bf16 w2
                 + 2 * 4 * 3 * Cout_p)                          # biases
        tails = nb_ * pad * (Cin + Cout_p) * 2
        tmp = (nb_ * (lt_ + pad) * (Cin + Cout_p) * 2           # xc, hc
               + nb_ * lt_ * Cout_p * 32)                       # acc/h1/acc2/out/res/y
        return in_buf + out_buf + w_buf + tails + tmp

    if lt is not None:
        lt = max(_round_up(lt, 8), lt_min)
    else:
        lt = max(lt_min, min(_round_up(L, 8), 2048))
        while cost(1, lt) > budget and lt > lt_min:              # VMEM fallback
            lt = max(lt_min, _round_up(lt // 2, 8))

    if nb is not None:
        return nb, lt
    nb_cap = max(1, N // 2)
    best = 1
    for c in range(1, nb_cap + 1):
        if N % c == 0 and cost(c, lt) <= budget:
            best = c
    return best, lt


# ----------------------------------------------------------------------------
# Public wrapper (PyTorch Conv1d NCL in / NCL out)
# ----------------------------------------------------------------------------
def temporal_block_pallas(x_ncl, params, *, kernel_size, dilation, n_outputs,
                          compute_dtype=jnp.bfloat16, nb=None, lt=None):
    """x_ncl: (N, Cin, L) float32. Returns (N, Cout, L) float32."""
    N, Cin, L = x_ncl.shape
    K = kernel_size
    pad = (K - 1) * dilation
    assert pad >= 1, "kernel_size==1 (pad==0) not supported"  # TODO(synk)
    Cout = n_outputs
    Cout_p = _round_up(Cout, LANE)

    budget, vmem_limit = _vmem_budget_bytes()
    Nb, Lt = _pick_tiles(N, L, pad, K, Cin, Cout, Cout_p, budget, nb=nb, lt=lt)
    assert N % Nb == 0
    Lp = _round_up(L, Lt)

    # Single layout pass in HBM: NCL -> NLC (f32, unpadded channels).  Channel
    # zero-extension, bf16 cast and the causal time pad all happen in-kernel /
    # in the carry scratch, so no padded copy of x is ever materialized in HBM.
    x_nlc = jnp.transpose(x_ncl, (0, 2, 1))                      # (N, L, Cin)
    if Lp != L:
        # Zero-pad the tail of time; causal conv -> padded rows never affect
        # outputs at t < L, and those output rows are sliced off below.
        x_nlc = jnp.pad(x_nlc, ((0, 0), (0, Lp - L), (0, 0)))

    kern = _make_kernel(K, dilation, pad, Nb, Lt, Cin, Cout, Cout_p, compute_dtype)

    out = pl.pallas_call(
        kern,
        out_shape=jax.ShapeDtypeStruct((N, Lp, Cout), jnp.float32),
        grid_spec=pltpu.PrefetchScalarGridSpec(
            num_scalar_prefetch=0,
            grid=(N // Nb, Lp // Lt),                 # (batch: parallel, time: arbitrary)
            in_specs=[
                pl.BlockSpec((Nb, Lt, Cin), lambda b, t: (b, t, 0)),
                pl.BlockSpec((K, Cin, 2 * Cout_p), lambda b, t: (0, 0, 0)),
                pl.BlockSpec((1, 2 * Cout_p), lambda b, t: (0, 0)),
                pl.BlockSpec((K, Cout_p, Cout_p), lambda b, t: (0, 0, 0)),
                pl.BlockSpec((1, Cout_p), lambda b, t: (0, 0)),
            ],
            out_specs=pl.BlockSpec((Nb, Lt, Cout), lambda b, t: (b, t, 0)),
            scratch_shapes=[
                pltpu.VMEM((Nb, pad, Cin), compute_dtype),       # x causal-halo carry
                pltpu.VMEM((Nb, pad, Cout_p), compute_dtype),    # h1 causal-halo carry
            ],
        ),
        compiler_params=pltpu.CompilerParams(
            dimension_semantics=("parallel", "arbitrary"),
            vmem_limit_bytes=vmem_limit),
    )(x_nlc, params["w1aug"], params["b1aug"], params["w2f"], params["b2"])

    return jnp.transpose(out[:, :L, :], (0, 2, 1))               # (N, Cout, L)


# ----------------------------------------------------------------------------
# Parameter construction.  weight_norm reparam: w = g * v / ||v||_2 (per output
# channel, over (Cin, K)), like PyTorch.  Kernel layout: per-tap weight slabs
# (K, C, Cout_p) with the residual 1x1 weight appended as extra output columns
# of the LAST tap of conv1 (augmented width 2*Cout_p).
# ----------------------------------------------------------------------------
def make_params(key, Cin, Cout, K, compute_dtype=jnp.bfloat16):
    ks = jax.random.split(key, 8)

    def wnorm_weight(kv, kg, shape):
        v = jax.random.normal(kv, shape, jnp.float32) * 0.3
        g = jax.random.uniform(kg, (shape[0],), jnp.float32, 0.5, 1.5)
        norm = jnp.sqrt(jnp.sum(v * v, axis=(1, 2), keepdims=True)) + 1e-12
        return g[:, None, None] * v / norm                       # (Cout, Cin, K)

    w1_t = wnorm_weight(ks[0], ks[1], (Cout, Cin, K))
    w2_t = wnorm_weight(ks[2], ks[3], (Cout, Cout, K))
    wd_t = jax.random.normal(ks[4], (Cout, Cin, 1), jnp.float32) * 0.3
    b1 = jax.random.normal(ks[5], (Cout,), jnp.float32) * 0.1
    b2 = jax.random.normal(ks[6], (Cout,), jnp.float32) * 0.1
    bd = jax.random.normal(ks[7], (Cout,), jnp.float32) * 0.1

    Cout_p = _round_up(Cout, LANE)

    def taps(w_t):                                  # (Cout, C, K) -> (K, C, Cout_p)
        w = jnp.transpose(w_t, (2, 1, 0))
        return jnp.pad(w, ((0, 0), (0, 0), (0, Cout_p - Cout)))

    # conv1 taps augmented with the residual 1x1 weight on the last tap.
    w1 = taps(w1_t)                                              # (K, Cin, Cout_p)
    wd = jnp.pad(jnp.transpose(wd_t[:, :, 0], (1, 0)),
                 ((0, 0), (0, Cout_p - Cout)))                   # (Cin, Cout_p)
    res_cols = jnp.zeros((K, Cin, Cout_p), jnp.float32).at[K - 1].set(wd)
    w1aug = jnp.concatenate([w1, res_cols], axis=-1).astype(compute_dtype)

    # conv2 taps: pad input-channel rows up to Cout_p as well.
    w2f = jnp.pad(taps(w2_t), ((0, 0), (0, Cout_p - Cout), (0, 0))
                  ).astype(compute_dtype)

    def pad_bias(b):
        return jnp.pad(b, (0, Cout_p - Cout))

    params = {
        "w1aug": w1aug,                                          # (K, Cin, 2*Cout_p) bf16
        "b1aug": jnp.concatenate([pad_bias(b1), pad_bias(bd)])[None, :],  # (1, 2*Cout_p)
        "w2f": w2f,                                              # (K, Cout_p, Cout_p) bf16
        "b2": pad_bias(b2)[None, :],                             # (1, Cout_p) f32
    }
    torch_layout = dict(w1=w1_t, b1=b1, w2=w2_t, b2=b2, wd=wd_t, bd=bd)
    return params, torch_layout


# ----------------------------------------------------------------------------
# Pure-JAX reference (PyTorch Conv1d + Chomp1d semantics).  With
# emulate_bf16=True, conv operands are rounded to bf16 (f32 accumulation),
# mirroring the MXU exactly up to accumulation order.
# ----------------------------------------------------------------------------
def reference_forward(x, tp, dilation, pad, emulate_bf16=False):
    dn = ("NCW", "OIW", "NCW")

    def r(v):
        return v.astype(jnp.bfloat16).astype(jnp.float32) if emulate_bf16 else v

    def conv(inp, w, b, dil, p):
        y = jax.lax.conv_general_dilated(
            r(inp), r(w), window_strides=(1,), padding=[(p, p)],
            rhs_dilation=(dil,), dimension_numbers=dn,
            precision=jax.lax.Precision.HIGHEST)
        return y + b[None, :, None]

    h = jnp.maximum(conv(x, tp["w1"], tp["b1"], dilation, pad)[:, :, :-pad], 0.0)
    h = jnp.maximum(conv(h, tp["w2"], tp["b2"], dilation, pad)[:, :, :-pad], 0.0)
    res = conv(x, tp["wd"], tp["bd"], 1, 0)
    return jnp.maximum(h + res, 0.0)


if __name__ == "__main__":
    # TemporalBlock(n_inputs=4, n_outputs=8, kernel_size=3, stride=1,
    #               dilation=2, padding=(3-1)*2=4, dropout=0.2)  [eval mode]
    N, Cin, Cout, L = 2, 4, 8, 16
    K, dilation = 3, 2
    pad = (K - 1) * dilation

    key = jax.random.PRNGKey(0)
    kx, kp = jax.random.split(key)
    x = jax.random.normal(kx, (N, Cin, L), jnp.float32)
    params, torch_params = make_params(kp, Cin, Cout, K)

    run_auto = jax.jit(functools.partial(
        temporal_block_pallas, kernel_size=K, dilation=dilation, n_outputs=Cout))
    # Force two time tiles (Lt=8) to exercise the causal-halo carry path.
    run_tiled = jax.jit(functools.partial(
        temporal_block_pallas, kernel_size=K, dilation=dilation, n_outputs=Cout,
        nb=1, lt=8))

    out_auto = jax.block_until_ready(run_auto(x, params))
    out_tiled = jax.block_until_ready(run_tiled(x, params))

    ref_bf16 = reference_forward(x, torch_params, dilation, pad, emulate_bf16=True)
    ref_f32 = reference_forward(x, torch_params, dilation, pad)

    for out in (out_auto, out_tiled):
        assert out.shape == (N, Cout, L)
        # Strict check vs. a bf16-emulating reference (only accumulation-order
        # differences remain), plus a loose sanity check vs. pure f32.
        err = float(jnp.max(jnp.abs(out - ref_bf16)))
        assert jnp.allclose(out, ref_bf16, atol=1e-3, rtol=1e-3), err
        assert jnp.allclose(out, ref_f32, atol=1e-1, rtol=1e-1)

    print("KERNEL_OK")
</pallas_src>

<mosaic_0001>
module attributes {stable_mosaic.version = 11 : i64} {
  func.func @kernel(%arg0: i32, %arg1: i32, %arg2: memref<1x16x4xf32, #tpu.memory_space<vmem>>, %arg3: memref<3x4x256xbf16, #tpu.memory_space<vmem>>, %arg4: memref<1x256xf32, #tpu.memory_space<vmem>>, %arg5: memref<3x128x128xbf16, #tpu.memory_space<vmem>>, %arg6: memref<1x128xf32, #tpu.memory_space<vmem>>, %arg7: memref<1x16x8xf32, #tpu.memory_space<vmem>>, %arg8: memref<1x4x4xbf16, #tpu.memory_space<vmem>>, %arg9: memref<1x4x128xbf16, #tpu.memory_space<vmem>>) attributes {dimension_semantics = [#tpu.dimension_semantics<parallel>, #tpu.dimension_semantics<arbitrary>], iteration_bounds = array<i64: 2, 1>, scalar_prefetch = 0 : i64, scratch_operands = 2 : i64, tpu.core_type = #tpu.core_type<tc>, window_params = [{transform_indices = @transform_0, window_bounds = array<i64: 1, 16, 4>}, {pipeline_mode = #tpu.pipeline_mode<synchronous>, transform_indices = @transform_1, window_bounds = array<i64: 3, 4, 256>}, {pipeline_mode = #tpu.pipeline_mode<synchronous>, transform_indices = @transform_2, window_bounds = array<i64: 1, 256>}, {pipeline_mode = #tpu.pipeline_mode<synchronous>, transform_indices = @transform_3, window_bounds = array<i64: 3, 128, 128>}, {pipeline_mode = #tpu.pipeline_mode<synchronous>, transform_indices = @transform_4, window_bounds = array<i64: 1, 128>}, {transform_indices = @transform_5, window_bounds = array<i64: 1, 16, 8>}]} {
    %c0_i32 = arith.constant 0 : i32
    %0 = arith.cmpi eq, %arg1, %c0_i32 : i32
    %1 = arith.extui %0 : i1 to i32
    %c0_i32_0 = arith.constant 0 : i32
    %2 = arith.cmpi ne, %1, %c0_i32_0 : i32
    scf.if %2 {
      %cst_46 = arith.constant 0.000000e+00 : bf16
      %67 = vector.broadcast %cst_46 : bf16 to vector<1x4x4xbf16>
      %c0_47 = arith.constant 0 : index
      %c0_48 = arith.constant 0 : index
      %c0_49 = arith.constant 0 : index
      %68 = vector.load %arg8[%c0_47, %c0_48, %c0_49] : memref<1x4x4xbf16, #tpu.memory_space<vmem>>, vector<1x4x4xbf16>
      tpu.vector_store %arg8[%c0_47, %c0_48, %c0_49], %67 {strides = array<i32>} : memref<1x4x4xbf16, #tpu.memory_space<vmem>>, vector<1x4x4xbf16>,
      %cst_50 = arith.constant 0.000000e+00 : bf16
      %69 = vector.broadcast %cst_50 : bf16 to vector<1x4x128xbf16>
      %c0_51 = arith.constant 0 : index
      %c0_52 = arith.constant 0 : index
      %c0_53 = arith.constant 0 : index
      %70 = vector.load %arg9[%c0_51, %c0_52, %c0_53] : memref<1x4x128xbf16, #tpu.memory_space<vmem>>, vector<1x4x128xbf16>
      tpu.vector_store %arg9[%c0_51, %c0_52, %c0_53], %69 {strides = array<i32>} : memref<1x4x128xbf16, #tpu.memory_space<vmem>>, vector<1x4x128xbf16>,
    } else {
    }
    %c0 = arith.constant 0 : index
    %c0_1 = arith.constant 0 : index
    %c0_2 = arith.constant 0 : index
    %3 = vector.load %arg2[%c0, %c0_1, %c0_2] : memref<1x16x4xf32, #tpu.memory_space<vmem>>, vector<1x16x4xf32>
    %4 = arith.truncf %3 : vector<1x16x4xf32> to vector<1x16x4xbf16>
    %c0_3 = arith.constant 0 : index
    %c0_4 = arith.constant 0 : index
    %c0_5 = arith.constant 0 : index
    %5 = vector.load %arg8[%c0_3, %c0_4, %c0_5] : memref<1x4x4xbf16, #tpu.memory_space<vmem>>, vector<1x4x4xbf16>
    %6 = tpu.concatenate %5, %4 in 1 : vector<1x4x4xbf16>, vector<1x16x4xbf16> -> vector<1x20x4xbf16>
    %7 = vector.extract_strided_slice %6 {offsets = [0, 0, 0], sizes = [1, 16, 4], strides = [1, 1, 1]} : vector<1x20x4xbf16> to vector<1x16x4xbf16>
    %8 = vector.shape_cast %7 : vector<1x16x4xbf16> to vector<16x4xbf16>
    %c0_6 = arith.constant 0 : index
    %c0_7 = arith.constant 0 : index
    %c0_8 = arith.constant 0 : index
    %9 = vector.load %arg3[%c0_6, %c0_7, %c0_8] : memref<3x4x256xbf16, #tpu.memory_space<vmem>>, vector<1x4x256xbf16>
    %10 = vector.shape_cast %9 : vector<1x4x256xbf16> to vector<4x256xbf16>
    %cst = arith.constant dense<0.000000e+00> : vector<16x256xf32>
    %11 = tpu.matmul %8, %10, %cst {dimension_numbers = #tpu.dot_dimension_numbers<[1], [0], [0], [1], [0, 0, 1, 1], [], []>} : vector<16x4xbf16>, vector<4x256xbf16>, vector<16x256xf32> -> vector<16x256xf32>
    %12 = vector.extract_strided_slice %6 {offsets = [0, 2, 0], sizes = [1, 16, 4], strides = [1, 1, 1]} : vector<1x20x4xbf16> to vector<1x16x4xbf16>
    %13 = vector.shape_cast %12 : vector<1x16x4xbf16> to vector<16x4xbf16>
    %c1 = arith.constant 1 : index
    %c0_9 = arith.constant 0 : index
    %c0_10 = arith.constant 0 : index
    %14 = vector.load %arg3[%c1, %c0_9, %c0_10] : memref<3x4x256xbf16, #tpu.memory_space<vmem>>, vector<1x4x256xbf16>
    %15 = vector.shape_cast %14 : vector<1x4x256xbf16> to vector<4x256xbf16>
    %cst_11 = arith.constant dense<0.000000e+00> : vector<16x256xf32>
    %16 = tpu.matmul %13, %15, %cst_11 {dimension_numbers = #tpu.dot_dimension_numbers<[1], [0], [0], [1], [0, 0, 1, 1], [], []>} : vector<16x4xbf16>, vector<4x256xbf16>, vector<16x256xf32> -> vector<16x256xf32>
    %17 = arith.addf %11, %16 : vector<16x256xf32>
    %18 = vector.extract_strided_slice %6 {offsets = [0, 4, 0], sizes = [1, 16, 4], strides = [1, 1, 1]} : vector<1x20x4xbf16> to vector<1x16x4xbf16>
    %19 = vector.shape_cast %18 : vector<1x16x4xbf16> to vector<16x4xbf16>
    %c2 = arith.constant 2 : index
    %c0_12 = arith.constant 0 : index
    %c0_13 = arith.constant 0 : index
    %20 = vector.load %arg3[%c2, %c0_12, %c0_13] : memref<3x4x256xbf16, #tpu.memory_space<vmem>>, vector<1x4x256xbf16>
    %21 = vector.shape_cast %20 : vector<1x4x256xbf16> to vector<4x256xbf16>
    %cst_14 = arith.constant dense<0.000000e+00> : vector<16x256xf32>
    %22 = tpu.matmul %19, %21, %cst_14 {dimension_numbers = #tpu.dot_dimension_numbers<[1], [0], [0], [1], [0, 0, 1, 1], [], []>} : vector<16x4xbf16>, vector<4x256xbf16>, vector<16x256xf32> -> vector<16x256xf32>
    %23 = arith.addf %17, %22 : vector<16x256xf32>
    %c0_15 = arith.constant 0 : index
    %c0_16 = arith.constant 0 : index
    %24 = vector.load %arg4[%c0_15, %c0_16] : memref<1x256xf32, #tpu.memory_space<vmem>>, vector<1x256xf32>
    %25 = vector.broadcast %24 : vector<1x256xf32> to vector<16x256xf32>
    %26 = arith.addf %23, %25 : vector<16x256xf32>
    %27 = vector.extract_strided_slice %26 {offsets = [0, 0], sizes = [16, 128], strides = [1, 1]} : vector<16x256xf32> to vector<16x128xf32>
    %cst_17 = arith.constant 0.000000e+00 : f32
    %28 = vector.broadcast %cst_17 : f32 to vector<16x128xf32>
    %29 = arith.maximumf %27, %28 : vector<16x128xf32>
    %30 = vector.extract_strided_slice %26 {offsets = [0, 128], sizes = [16, 128], strides = [1, 1]} : vector<16x256xf32> to vector<16x128xf32>
    %31 = arith.truncf %29 : vector<16x128xf32> to vector<16x128xbf16>
    %32 = vector.shape_cast %31 : vector<16x128xbf16> to vector<1x16x128xbf16>
    %c0_18 = arith.constant 0 : index
    %c0_19 = arith.constant 0 : index
    %c0_20 = arith.constant 0 : index
    %33 = vector.load %arg9[%c0_18, %c0_19, %c0_20] : memref<1x4x128xbf16, #tpu.memory_space<vmem>>, vector<1x4x128xbf16>
    %34 = tpu.concatenate %33, %32 in 1 : vector<1x4x128xbf16>, vector<1x16x128xbf16> -> vector<1x20x128xbf16>
    %35 = vector.extract_strided_slice %34 {offsets = [0, 0, 0], sizes = [1, 16, 128], strides = [1, 1, 1]} : vector<1x20x128xbf16> to vector<1x16x128xbf16>
    %36 = vector.shape_cast %35 : vector<1x16x128xbf16> to vector<16x128xbf16>
    %c0_21 = arith.constant 0 : index
    %c0_22 = arith.constant 0 : index
    %c0_23 = arith.constant 0 : index
    %37 = vector.load %arg5[%c0_21, %c0_22, %c0_23] : memref<3x128x128xbf16, #tpu.memory_space<vmem>>, vector<1x128x128xbf16>
    %38 = vector.shape_cast %37 : vector<1x128x128xbf16> to vector<128x128xbf16>
    %cst_24 = arith.constant dense<0.000000e+00> : vector<16x128xf32>
    %39 = tpu.matmul %36, %38, %cst_24 {dimension_numbers = #tpu.dot_dimension_numbers<[1], [0], [0], [1], [0, 0, 1, 1], [], []>} : vector<16x128xbf16>, vector<128x128xbf16>, vector<16x128xf32> -> vector<16x128xf32>
    %40 = vector.extract_strided_slice %34 {offsets = [0, 2, 0], sizes = [1, 16, 128], strides = [1, 1, 1]} : vector<1x20x128xbf16> to vector<1x16x128xbf16>
    %41 = vector.shape_cast %40 : vector<1x16x128xbf16> to vector<16x128xbf16>
    %c1_25 = arith.constant 1 : index
    %c0_26 = arith.constant 0 : index
    %c0_27 = arith.constant 0 : index
    %42 = vector.load %arg5[%c1_25, %c0_26, %c0_27] : memref<3x128x128xbf16, #tpu.memory_space<vmem>>, vector<1x128x128xbf16>
    %43 = vector.shape_cast %42 : vector<1x128x128xbf16> to vector<128x128xbf16>
    %cst_28 = arith.constant dense<0.000000e+00> : vector<16x128xf32>
    %44 = tpu.matmul %41, %43, %cst_28 {dimension_numbers = #tpu.dot_dimension_numbers<[1], [0], [0], [1], [0, 0, 1, 1], [], []>} : vector<16x128xbf16>, vector<128x128xbf16>, vector<16x128xf32> -> vector<16x128xf32>
    %45 = arith.addf %39, %44 : vector<16x128xf32>
    %46 = vector.extract_strided_slice %34 {offsets = [0, 4, 0], sizes = [1, 16, 128], strides = [1, 1, 1]} : vector<1x20x128xbf16> to vector<1x16x128xbf16>
    %47 = vector.shape_cast %46 : vector<1x16x128xbf16> to vector<16x128xbf16>
    %c2_29 = arith.constant 2 : index
    %c0_30 = arith.constant 0 : index
    %c0_31 = arith.constant 0 : index
    %48 = vector.load %arg5[%c2_29, %c0_30, %c0_31] : memref<3x128x128xbf16, #tpu.memory_space<vmem>>, vector<1x128x128xbf16>
    %49 = vector.shape_cast %48 : vector<1x128x128xbf16> to vector<128x128xbf16>
    %cst_32 = arith.constant dense<0.000000e+00> : vector<16x128xf32>
    %50 = tpu.matmul %47, %49, %cst_32 {dimension_numbers = #tpu.dot_dimension_numbers<[1], [0], [0], [1], [0, 0, 1, 1], [], []>} : vector<16x128xbf16>, vector<128x128xbf16>, vector<16x128xf32> -> vector<16x128xf32>
    %51 = arith.addf %45, %50 : vector<16x128xf32>
    %c0_33 = arith.constant 0 : index
    %c0_34 = arith.constant 0 : index
    %52 = vector.load %arg6[%c0_33, %c0_34] : memref<1x128xf32, #tpu.memory_space<vmem>>, vector<1x128xf32>
    %53 = vector.broadcast %52 : vector<1x128xf32> to vector<16x128xf32>
    %54 = arith.addf %51, %53 : vector<16x128xf32>
    %cst_35 = arith.constant 0.000000e+00 : f32
    %55 = vector.broadcast %cst_35 : f32 to vector<16x128xf32>
    %56 = arith.maximumf %54, %55 : vector<16x128xf32>
    %57 = arith.addf %56, %30 : vector<16x128xf32>
    %cst_36 = arith.constant 0.000000e+00 : f32
    %58 = vector.broadcast %cst_36 : f32 to vector<16x128xf32>
    %59 = arith.maximumf %57, %58 : vector<16x128xf32>
    %60 = vector.shape_cast %59 : vector<16x128xf32> to vector<1x16x128xf32>
    %61 = vector.extract_strided_slice %60 {offsets = [0, 0, 0], sizes = [1, 16, 8], strides = [1, 1, 1]} : vector<1x16x128xf32> to vector<1x16x8xf32>
    %c0_37 = arith.constant 0 : index
    %c0_38 = arith.constant 0 : index
    %c0_39 = arith.constant 0 : index
    %62 = vector.load %arg7[%c0_37, %c0_38, %c0_39] : memref<1x16x8xf32, #tpu.memory_space<vmem>>, vector<1x16x8xf32>
    tpu.vector_store %arg7[%c0_37, %c0_38, %c0_39], %61 {strides = array<i32>} : memref<1x16x8xf32, #tpu.memory_space<vmem>>, vector<1x16x8xf32>,
    %63 = vector.extract_strided_slice %6 {offsets = [0, 16, 0], sizes = [1, 4, 4], strides = [1, 1, 1]} : vector<1x20x4xbf16> to vector<1x4x4xbf16>
    %c0_40 = arith.constant 0 : index
    %c0_41 = arith.constant 0 : index
    %c0_42 = arith.constant 0 : index
    %64 = vector.load %arg8[%c0_40, %c0_41, %c0_42] : memref<1x4x4xbf16, #tpu.memory_space<vmem>>, vector<1x4x4xbf16>
    tpu.vector_store %arg8[%c0_40, %c0_41, %c0_42], %63 {strides = array<i32>} : memref<1x4x4xbf16, #tpu.memory_space<vmem>>, vector<1x4x4xbf16>,
    %65 = vector.extract_strided_slice %34 {offsets = [0, 16, 0], sizes = [1, 4, 128], strides = [1, 1, 1]} : vector<1x20x128xbf16> to vector<1x4x128xbf16>
    %c0_43 = arith.constant 0 : index
    %c0_44 = arith.constant 0 : index
    %c0_45 = arith.constant 0 : index
    %66 = vector.load %arg9[%c0_43, %c0_44, %c0_45] : memref<1x4x128xbf16, #tpu.memory_space<vmem>>, vector<1x4x128xbf16>
    tpu.vector_store %arg9[%c0_43, %c0_44, %c0_45], %65 {strides = array<i32>} : memref<1x4x128xbf16, #tpu.memory_space<vmem>>, vector<1x4x128xbf16>,
    return
  }
  func.func @transform_0(%arg0: i32, %arg1: i32) -> (i32, i32, i32) {
    %c0_i32 = arith.constant 0 : i32
    %c0_i32_0 = arith.constant 0 : i32
    return %arg0, %arg1, %c0_i32 : i32, i32, i32
  }
  func.func @transform_1(%arg0: i32, %arg1: i32) -> (i32, i32, i32) {
    %c0_i32 = arith.constant 0 : i32
    %c0_i32_0 = arith.constant 0 : i32
    %c0_i32_1 = arith.constant 0 : i32
    %c0_i32_2 = arith.constant 0 : i32
    return %c0_i32, %c0_i32_0, %c0_i32_1 : i32, i32, i32
  }
  func.func @transform_2(%arg0: i32, %arg1: i32) -> (i32, i32) {
    %c0_i32 = arith.constant 0 : i32
    %c0_i32_0 = arith.constant 0 : i32
    %c0_i32_1 = arith.constant 0 : i32
    return %c0_i32, %c0_i32_0 : i32, i32
  }
  func.func @transform_3(%arg0: i32, %arg1: i32) -> (i32, i32, i32) {
    %c0_i32 = arith.constant 0 : i32
    %c0_i32_0 = arith.constant 0 : i32
    %c0_i32_1 = arith.constant 0 : i32
    %c0_i32_2 = arith.constant 0 : i32
    return %c0_i32, %c0_i32_0, %c0_i32_1 : i32, i32, i32
  }
  func.func @transform_4(%arg0: i32, %arg1: i32) -> (i32, i32) {
    %c0_i32 = arith.constant 0 : i32
    %c0_i32_0 = arith.constant 0 : i32
    %c0_i32_1 = arith.constant 0 : i32
    return %c0_i32, %c0_i32_0 : i32, i32
  }
  func.func @transform_5(%arg0: i32, %arg1: i32) -> (i32, i32, i32) {
    %c0_i32 = arith.constant 0 : i32
    %c0_i32_0 = arith.constant 0 : i32
    return %arg0, %arg1, %c0_i32 : i32, i32, i32
  }
}

</mosaic_0001>

<llo_original>
// kernel: temporal_block_pallas.1
$region0: #{temporal_block_pallas.1}
  #allocation0 [shape = 'u32[]', space=smem, size = 0x4, offset = 0x4, fixed_abs, tag = 'smem constant byte address 0x4 - core index']
  #allocation1 [shape = 'u32[144,128]{1,0:T(1,128)}', space=vmem, size = 0x12000, scoped, tag = 'internal scratch']
  #allocation2 [shape = 'bf16[1,4,4]{2,1,0:T(4,128)(2,1)}', space=vmem, size = 0x400, scoped, tag = 'scratch operand']
  #allocation3 [shape = 'bf16[1,4,128]{2,1,0:T(4,128)(2,1)}', space=vmem, size = 0x400, scoped, tag = 'scratch operand']
  %s0 = inlined_call_operand.hbm [shape: f32[2,16,4], index: 0, kind: input, shape index: {}]
  %s1 = inlined_call_operand.hbm [shape: bf16[3,4,256], index: 1, kind: input, shape index: {}]
  %s2 = inlined_call_operand.hbm [shape: f32[1,256], index: 2, kind: input, shape index: {}]
  %s3 = inlined_call_operand.hbm [shape: bf16[3,128,128], index: 3, kind: input, shape index: {}]
  %s4 = inlined_call_operand.hbm [shape: f32[1,128], index: 4, kind: input, shape index: {}]
  %s5 = inlined_call_operand.hbm [shape: f32[2,16,8], index: 5, kind: output, shape index: {}]
  %s6 = sld [smem:[#allocation0]]
  $region77: #{temporal_block_pallas.1} parent=0
    _
  %s8 = ssub.s32 1, %s6
  %s9 = scalar_select 0, %s8, %s6
  $region1: #{temporal_block_pallas.1} parent=0
    #allocation4 [shape = 'u8[16384]{0}', space=vmem, size = 0x4000, scoped, tag = 'input window, operand 0']
    #allocation5 [shape = 's32[2]{0}', space=sflag, size = 0x8, scoped, tag = 'scoped memory for temporal_block_pallas.1']
    #allocation6 [shape = 's32[2]{0}', space=sflag, size = 0x8, scoped, tag = 'scoped memory for temporal_block_pallas.1']
    #allocation7 [shape = 'u8[6144]{0}', space=vmem, size = 0x1800, scoped, tag = 'input window, operand 1, single buffered']
    #allocation8 [shape = 's32[1]{0}', space=sflag, size = 0x4, scoped, tag = 'scoped memory for temporal_block_pallas.1']
    #allocation9 [shape = 'u8[1024]{0}', space=vmem, size = 0x400, scoped, tag = 'input window, operand 2, single buffered']
    #allocation10 [shape = 'u8[98304]{0}', space=vmem, size = 0x18000, scoped, tag = 'input window, operand 3, single buffered']
    #allocation11 [shape = 's32[1]{0}', space=sflag, size = 0x4, scoped, tag = 'scoped memory for temporal_block_pallas.1']
    #allocation12 [shape = 'u8[512]{0}', space=vmem, size = 0x400, scoped, tag = 'input window, operand 4, single buffered']
    #allocation13 [shape = 'u8[16384]{0}', space=vmem, size = 0x4000, scoped, tag = 'output window, operand 0']
    %10 = vsyncpa [#allocation5], 0
    %s11 = scalar_lea.sflag [#allocation5], 1
    %12 = vsyncpa %s11, 0
    %13 = vsyncpa [#allocation8], 0
    %14 = vsyncpa [#allocation11], 0
    %15 = vsyncpa [#allocation6], 0
    %s16 = scalar_lea.sflag [#allocation6], 1
    %17 = vsyncpa %s16, 0
    loop: start=0, step=1, limit=4
    $region2: #{temporal_block_pallas.1} parent=1 // loop_pre_header
      _
    $region3: #{temporal_block_pallas.1} parent=1 // loop_header
      %s19 = sphi 0, %s23
      %p20 = scmp.ge.s32.totalorder %s19, 4
      %s26 = sphi 0, %s38
      %s27 = sphi 0, %s34
      %s28 = sphi 0, %s26
      %s29 = sphi 0, %s27
      %s30 = sphi 0, %s28
      %s31 = sphi 0, %s29
      %s43 = sphi 0, %s45
      %s46 = sphi 0, %s43
      %s47 = sphi 0, %s46
      %s63 = sphi 0, %s47
      %s67 = sphi 0, %s67
      %s69 = sphi 0, %s67
      %s70 = sphi 0, %s69
      %s84 = sphi 0, %s70
      %s88 = sphi 0, %s88
      %s90 = sphi 0, %s88
      %s91 = sphi 0, %s90
      %s105 = sphi 0, %s91
      %s109 = sphi 0, %s109
      %s111 = sphi 0, %s109
      %s112 = sphi 0, %s111
      %s126 = sphi 0, %s112
      %s130 = sphi 0, %s130
      %s132 = sphi 0, %s130
      %s133 = sphi 0, %s132
      %s147 = sphi 0, %s133
      %s155 = sphi 0, %s157
      %s158 = sphi 0, %s155
      %s159 = sphi 0, %s158
      %s175 = sphi 0, %s159
    $region4: #{temporal_block_pallas.1} parent=1 // loop_header_branch
      %22 = sbr.rel (%p20) target = $region8
    $region5: #{temporal_block_pallas.1} parent=1 // loop_body
      %s24 = ssub.s32 %s19, 1
      %s25 = ssub.s32 %s19, 2
      %s32 = sadd.s32 1, %s27
      %p33 = scmp.ge.s32.totalorder %s32, 1
      %s34 = scalar_select %p33, 0, %s32
      %s35 = sadd.s32 1, %s26
      %s36 = scalar_select %p33, %s35, %s26
      %p37 = scmp.ge.s32.totalorder %s36, 2
      %s38 = scalar_select %p37, 0, %s36
      %s39 = ssub.s32 %s26, %s38
      %s40 = ssub.s32 %s27, %s34
      %s41 = sor.u32 %s39, %s40
      %p42 = scmp.eq.s32.totalorder %s41, 0
      %s44 = sadd.s32 %s43, 1
      %s45 = scalar_select %p42, %s43, %s44
      %p48 = pneg %p42
      %p49 = scmp.eq.s32.totalorder %s19, 1
      %p50 = por %p48, %p49
      %p51 = scmp.ne.s32.totalorder %s43, %s46
      %p52 = scmp.eq.s32.totalorder %s19, 0
      %p53 = por %p51, %p52
      %p54 = scmp.ne.s32.totalorder %s43, %s46
      %p55 = scmp.eq.s32.totalorder %s24, 1
      %p56 = por %p54, %p55
      %p57 = scmp.ne.s32.totalorder %s46, %s47
      %p58 = scmp.eq.s32.totalorder %s24, 0
      %p59 = por %p57, %p58
      %p60 = scmp.ne.s32.totalorder %s46, %s47
      %p61 = scmp.eq.s32.totalorder %s25, 1
      %p62 = por %p60, %p61
      %p64 = scmp.ne.s32.totalorder %s47, %s63
      %p65 = scmp.eq.s32.totalorder %s25, 0
      %p66 = por %p64, %p65
      %s68 = sadd.s32 %s67, 1
      %p71 = scmp.eq.s32.totalorder %s19, 1
      %p72 = scmp.ne.s32.totalorder %s67, %s69
      %p73 = scmp.eq.s32.totalorder %s19, 0
      %p74 = por %p72, %p73
      %p75 = scmp.ne.s32.totalorder %s67, %s69
      %p76 = scmp.eq.s32.totalorder %s24, 1
      %p77 = por %p75, %p76
      %p78 = scmp.ne.s32.totalorder %s69, %s70
      %p79 = scmp.eq.s32.totalorder %s24, 0
      %p80 = por %p78, %p79
      %p81 = scmp.ne.s32.totalorder %s69, %s70
      %p82 = scmp.eq.s32.totalorder %s25, 1
      %p83 = por %p81, %p82
      %p85 = scmp.ne.s32.totalorder %s70, %s84
      %p86 = scmp.eq.s32.totalorder %s25, 0
      %p87 = por %p85, %p86
      %s89 = sadd.s32 %s88, 1
      %p92 = scmp.eq.s32.totalorder %s19, 1
      %p93 = scmp.ne.s32.totalorder %s88, %s90
      %p94 = scmp.eq.s32.totalorder %s19, 0
      %p95 = por %p93, %p94
      %p96 = scmp.ne.s32.totalorder %s88, %s90
      %p97 = scmp.eq.s32.totalorder %s24, 1
      %p98 = por %p96, %p97
      %p99 = scmp.ne.s32.totalorder %s90, %s91
      %p100 = scmp.eq.s32.totalorder %s24, 0
      %p101 = por %p99, %p100
      %p102 = scmp.ne.s32.totalorder %s90, %s91
      %p103 = scmp.eq.s32.totalorder %s25, 1
      %p104 = por %p102, %p103
      %p106 = scmp.ne.s32.totalorder %s91, %s105
      %p107 = scmp.eq.s32.totalorder %s25, 0
      %p108 = por %p106, %p107
      %s110 = sadd.s32 %s109, 1
      %p113 = scmp.eq.s32.totalorder %s19, 1
      %p114 = scmp.ne.s32.totalorder %s109, %s111
      %p115 = scmp.eq.s32.totalorder %s19, 0
      %p116 = por %p114, %p115
      %p117 = scmp.ne.s32.totalorder %s109, %s111
      %p118 = scmp.eq.s32.totalorder %s24, 1
      %p119 = por %p117, %p118
      %p120 = scmp.ne.s32.totalorder %s111, %s112
      %p121 = scmp.eq.s32.totalorder %s24, 0
      %p122 = por %p120, %p121
      %p123 = scmp.ne.s32.totalorder %s111, %s112
      %p124 = scmp.eq.s32.totalorder %s25, 1
      %p125 = por %p123, %p124
      %p127 = scmp.ne.s32.totalorder %s112, %s126
      %p128 = scmp.eq.s32.totalorder %s25, 0
      %p129 = por %p127, %p128
      %s131 = sadd.s32 %s130, 1
      %p134 = scmp.eq.s32.totalorder %s19, 1
      %p135 = scmp.ne.s32.totalorder %s130, %s132
      %p136 = scmp.eq.s32.totalorder %s19, 0
      %p137 = por %p135, %p136
      %p138 = scmp.ne.s32.totalorder %s130, %s132
      %p139 = scmp.eq.s32.totalorder %s24, 1
      %p140 = por %p138, %p139
      %p141 = scmp.ne.s32.totalorder %s132, %s133
      %p142 = scmp.eq.s32.totalorder %s24, 0
      %p143 = por %p141, %p142
      %p144 = scmp.ne.s32.totalorder %s132, %s133
      %p145 = scmp.eq.s32.totalorder %s25, 1
      %p146 = por %p144, %p145
      %p148 = scmp.ne.s32.totalorder %s133, %s147
      %p149 = scmp.eq.s32.totalorder %s25, 0
      %p150 = por %p148, %p149
      %s151 = ssub.s32 %s26, %s38
      %s152 = ssub.s32 %s27, %s34
      %s153 = sor.u32 %s151, %s152
      %p154 = scmp.eq.s32.totalorder %s153, 0
      %s156 = sadd.s32 %s155, 1
      %s157 = scalar_select %p154, %s155, %s156
      %p160 = pneg %p154
      %p161 = scmp.eq.s32.totalorder %s19, 1
      %p162 = por %p160, %p161
      %p163 = scmp.ne.s32.totalorder %s155, %s158
      %p164 = scmp.eq.s32.totalorder %s19, 0
      %p165 = por %p163, %p164
      %p166 = scmp.ne.s32.totalorder %s155, %s158
      %p167 = scmp.eq.s32.totalorder %s24, 1
      %p168 = por %p166, %p167
      %p169 = scmp.ne.s32.totalorder %s158, %s159
      %p170 = scmp.eq.s32.totalorder %s24, 0
      %p171 = por %p169, %p170
      %p172 = scmp.ne.s32.totalorder %s158, %s159
      %p173 = scmp.eq.s32.totalorder %s25, 1
      %p174 = por %p172, %p173
      %p176 = scmp.ne.s32.totalorder %s159, %s175
      %p177 = scmp.eq.s32.totalorder %s25, 0
      %p178 = por %p176, %p177
      %p179 = scmp.le.s32.totalorder 1, %s19
      %p180 = scmp.lt.s32.totalorder %s19, 3
      %p181 = pnand %p179, %p180
      %p182 = pneg %p181
      // Predicated region
      $region9: #{temporal_block_pallas.1} parent=5 // pred_check
        _
      $region10: #{temporal_block_pallas.1} parent=5 // pred_check_branch
        %184 = sbr.rel (%p181) target = $region12
      $region11: #{temporal_block_pallas.1} parent=5 // pred_region
        %s185 = ssub.s32 %s19, 1
        // Predicated region
        $region13: #{temporal_block_pallas.1} parent=11 // pred_check
          %p186 = pneg %p80
        $region14: #{temporal_block_pallas.1} parent=11 // pred_check_branch
          %188 = sbr.rel (%p186) target = $region16
        $region15: #{temporal_block_pallas.1} parent=11 // pred_region
          %s190 = ssub.s32 192, 192
          %191 = vsyncadd [#allocation8], %s190
          %s192 = sshll.u32 [#allocation7], 4
          %s193 = int_to_ptr.vmem [resolvable:$true] %s192
          %198 = dma.hbm_to_vmem [thread:$0]  %s1, 192, %s193, [#allocation8], 64, 64, 4
        $region16: #{temporal_block_pallas.1} parent=11 // pred_fallthru
          _
        // Predicated region
        $region17: #{temporal_block_pallas.1} parent=11 // pred_check
          %p199 = pneg %p101
        $region18: #{temporal_block_pallas.1} parent=11 // pred_check_branch
          %201 = sbr.rel (%p199) target = $region20
        $region19: #{temporal_block_pallas.1} parent=11 // pred_region
          %s203 = ssub.s32 32, 32
          %204 = vsyncadd [#allocation8], %s203
          %s206 = sshll.u32 [#allocation9], 4
          %s207 = int_to_ptr.vmem [resolvable:$true] %s206
          %209 = dma.hbm_to_vmem [thread:$0]  %s2, 32, %s207, [#allocation8]
        $region20: #{temporal_block_pallas.1} parent=11 // pred_fallthru
          _
        // Predicated region
        $region21: #{temporal_block_pallas.1} parent=11 // pred_check
          %p210 = pneg %p122
        $region22: #{temporal_block_pallas.1} parent=11 // pred_check_branch
          %212 = sbr.rel (%p210) target = $region24
        $region23: #{temporal_block_pallas.1} parent=11 // pred_region
          %s214 = ssub.s32 3072, 3072
          %215 = vsyncadd [#allocation11], %s214
          %s216 = sshll.u32 [#allocation10], 4
          %s217 = int_to_ptr.vmem [resolvable:$true] %s216
          %222 = dma.hbm_to_vmem [thread:$0]  %s3, 3072, %s217, [#allocation11], 64, 64, 4
        $region24: #{temporal_block_pallas.1} parent=11 // pred_fallthru
          _
        // Predicated region
        $region25: #{temporal_block_pallas.1} parent=11 // pred_check
          %p223 = pneg %p143
        $region26: #{temporal_block_pallas.1} parent=11 // pred_check_branch
          %225 = sbr.rel (%p223) target = $region28
        $region27: #{temporal_block_pallas.1} parent=11 // pred_region
          %s227 = ssub.s32 16, 16
          %228 = vsyncadd [#allocation11], %s227
          %s230 = sshll.u32 [#allocation12], 4
          %s231 = int_to_ptr.vmem [resolvable:$true] %s230
          %233 = dma.hbm_to_vmem [thread:$0]  %s4, 16, %s231, [#allocation11]
        $region28: #{temporal_block_pallas.1} parent=11 // pred_fallthru
          _
      $region12: #{temporal_block_pallas.1} parent=5 // pred_fallthru
        _
      %p234 = scmp.lt.s32.totalorder %s19, 2
      // Predicated region
      $region29: #{temporal_block_pallas.1} parent=5 // pred_check
        %p235 = pneg %p234
      $region30: #{temporal_block_pallas.1} parent=5 // pred_check_branch
        %237 = sbr.rel (%p235) target = $region32
      $region31: #{temporal_block_pallas.1} parent=5 // pred_region
        // Predicated region
        $region33: #{temporal_block_pallas.1} parent=31 // pred_check
          %p238 = pneg %p53
        $region34: #{temporal_block_pallas.1} parent=31 // pred_check_branch
          %240 = sbr.rel (%p238) target = $region36
        $region35: #{temporal_block_pallas.1} parent=31 // pred_region
          %s241 = sand.u32 %s43, 1
          %s242 = scalar_lea.sflag [#allocation5], %s241
          %s243 = sand.u32 %s43, 1
          %s244 = smul.addr %s243, 16
          %s245 = scalar_lea.vmem [#allocation4], %s244
          %s246 = smul.u32 2, %s27
          %s248 = ssub.s32 256, 256
          %249 = vsyncadd %s242, %s248
          %s250 = smul.addr %s26, 2
          %s251 = sadd.s32 %s246, %s250
          %s252 = smul.addr %s251, 128
          %s253 = scalar_lea.hbm %s0, %s252
          %s254 = sshll.u32 %s245, 4
          %s255 = int_to_ptr.vmem [resolvable:$true] %s254
          %260 = dma.hbm_to_vmem [thread:$0]  %s253, 256, %s255, %s242, 128, 128, 8
        $region36: #{temporal_block_pallas.1} parent=31 // pred_fallthru
          _
      $region32: #{temporal_block_pallas.1} parent=5 // pred_fallthru
        _
      %p261 = scmp.le.s32.totalorder 1, %s19
      %p262 = scmp.lt.s32.totalorder %s19, 3
      %p263 = pnand %p261, %p262
      %p264 = pneg %p263
      // Predicated region
      $region37: #{temporal_block_pallas.1} parent=5 // pred_check
        _
      $region38: #{temporal_block_pallas.1} parent=5 // pred_check_branch
        %266 = sbr.rel (%p263) target = $region40
      $region39: #{temporal_block_pallas.1} parent=5 // pred_region
        %s267 = ssub.s32 %s19, 1
        %s268 = sand.u32 %s46, 1
        %s269 = scalar_lea.sflag [#allocation5], %s268
        %s270 = sand.u32 %s46, 1
        %s271 = smul.addr %s270, 16
        %s272 = scalar_lea.vmem [#allocation4], %s271
        // Predicated region
        $region41: #{temporal_block_pallas.1} parent=39 // pred_check
          %p273 = pneg %p59
        $region42: #{temporal_block_pallas.1} parent=39 // pred_check_branch
          %275 = sbr.rel (%p273) target = $region44
        $region43: #{temporal_block_pallas.1} parent=39 // pred_region
          %276 = dma.done %s269, 256
        $region44: #{temporal_block_pallas.1} parent=39 // pred_fallthru
          _
        // Predicated region
        $region45: #{temporal_block_pallas.1} parent=39 // pred_check
          %p277 = pneg %p80
        $region46: #{temporal_block_pallas.1} parent=39 // pred_check_branch
          %279 = sbr.rel (%p277) target = $region48
        $region47: #{temporal_block_pallas.1} parent=39 // pred_region
          %280 = dma.done [#allocation8], 192
        $region48: #{temporal_block_pallas.1} parent=39 // pred_fallthru
          _
        // Predicated region
        $region49: #{temporal_block_pallas.1} parent=39 // pred_check
          %p281 = pneg %p101
        $region50: #{temporal_block_pallas.1} parent=39 // pred_check_branch
          %283 = sbr.rel (%p281) target = $region52
        $region51: #{temporal_block_pallas.1} parent=39 // pred_region
          %284 = dma.done [#allocation8], 32
        $region52: #{temporal_block_pallas.1} parent=39 // pred_fallthru
          _
        // Predicated region
        $region53: #{temporal_block_pallas.1} parent=39 // pred_check
          %p285 = pneg %p122
        $region54: #{temporal_block_pallas.1} parent=39 // pred_check_branch
          %287 = sbr.rel (%p285) target = $region56
        $region55: #{temporal_block_pallas.1} parent=39 // pred_region
          %288 = dma.done [#allocation11], 3072
        $region56: #{temporal_block_pallas.1} parent=39 // pred_fallthru
          _
        // Predicated region
        $region57: #{temporal_block_pallas.1} parent=39 // pred_check
          %p289 = pneg %p143
        $region58: #{temporal_block_pallas.1} parent=39 // pred_check_branch
          %291 = sbr.rel (%p289) target = $region60
        $region59: #{temporal_block_pallas.1} parent=39 // pred_region
          %292 = dma.done [#allocation11], 16
        $region60: #{temporal_block_pallas.1} parent=39 // pred_fallthru
          _
        %s293 = sand.u32 %s46, 1
        %s294 = scalar_lea.sflag [#allocation5], %s293
        %s295 = sand.u32 %s46, 1
        %s296 = smul.addr %s295, 16
        %s297 = scalar_lea.vmem [#allocation4], %s296
        %p298 = pneg %p59
        %p299 = pneg %p56
        %p300 = pneg %p80
        %p301 = pneg %p77
        %p302 = pneg %p101
        %p303 = pneg %p98
        %p304 = pneg %p122
        %p305 = pneg %p119
        %p306 = pneg %p143
        %p307 = pneg %p140
        %p308 = pneg %p171
        %p309 = pneg %p168
        %s310 = sand.u32 %s158, 1
        %s311 = scalar_lea.sflag [#allocation6], %s310
        %s312 = sand.u32 %s158, 1
        %s313 = smul.addr %s312, 16
        %s314 = scalar_lea.vmem [#allocation13], %s313
        %s315 = smul.u32 2, %s29
        %s316 = smul.u32 2, %s29
        %p318 = scmp.eq.s32.totalorder %s29, 0
        // Predicated region
        $region61: #{temporal_block_pallas.1} parent=39 // pred_check
          %p319 = pneg %p318
        $region62: #{temporal_block_pallas.1} parent=39 // pred_check_branch
          %321 = sbr.rel (%p319) target = $region64
        $region63: #{temporal_block_pallas.1} parent=39 // pred_region
          %vm322 = vcmask 25600
          %323 = vst.msk [vmem:[#allocation2] sm:$0x3] %vm322, 0
          %324 = vst [vmem:[#allocation3] sm:$0x3] 0
        $region64: #{temporal_block_pallas.1} parent=39 // pred_fallthru
          _
        %v325 = vld [vmem:[%s272] sm:$0xff]
        %v326 = vld [vmem:[%s272 + $0x8] sm:$0xff]
        %v327 = vpack.c.bf16 %v326, %v325
        %v328 = vld [vmem:[#allocation2] sm:$0x3]
        %v330 = vrot.slane %v327, 6
        %vm332 = vcmask 1041408
        %v335 = vsel %vm332, %v328, %v330
        %v336 = vld [vmem:[#allocation7] sm:$0xf]
        %s337 = scalar_lea.vmem [#allocation7], 4
        %v338 = vld [vmem:[%s337] sm:$0xf]
        %vm340 = vcmask 1046528
        %v341 = vrot.slane %v335, 1
        %v342 = vrot.slane %v330, 1
        %v343 = vsel %vm340, %v341, %v342
        %v346 = vunpack.c.l.s4 1983009808
        %v347 = vunpack.c.0.s8 %v346
        %v348 = vlaneseq
        %v349 = vshrl.u32 %v348, 7
        %v350 = vsub.s32 %v347, %v349
        %v351 = vrot.slane %v338, %v350
        %v352 = vcombine.high %v351, %v351
        %vm353 = vcmask 31744
        %v355 = vsel %vm353, %v343, 0
        %v358 = vsel %vm332, %v351, 0
        %v361 = vsel %vm332, %v352, 0
        %363 = vmatprep.subr.bf16.mxu0 %v361
        %364 = vmatpush1.bf16.msra.mxu0 %v358
        %365 = vmatprep.subr.bf16.mxu0 0
        %366 = vmatpush1.bf16.msra.mxu0 0
        %367 = vmatprep.subr.bf16.mxu0 0
        %368 = vmatpush1.bf16.msra.mxu0 0
        %369 = vmatprep.subr.bf16.mxu0 0
        %370 = vmatpush1.bf16.msra.mxu0 0
        %371 = vmatprep.subr.bf16.mxu0 0
        %372 = vmatpush1.bf16.msra.mxu0 0
        %373 = vmatprep.subr.bf16.mxu0 0
        %374 = vmatpush1.bf16.msra.mxu0 0
        %375 = vmatprep.subr.bf16.mxu0 0
        %376 = vmatpush1.bf16.msra.mxu0 0
        %377 = vmatprep.subr.bf16.mxu0 0
        %378 = vmatpush1.bf16.msra.mxu0 0
        %379 = vmatprep.subr.bf16.mxu0 0
        %380 = vmatpush1.bf16.msra.mxu0 0
        %381 = vmatprep.subr.bf16.mxu0 0
        %382 = vmatpush1.bf16.msra.mxu0 0
        %383 = vmatprep.subr.bf16.mxu0 0
        %384 = vmatpush1.bf16.msra.mxu0 0
        %385 = vmatprep.subr.bf16.mxu0 0
        %386 = vmatpush1.bf16.msra.mxu0 0
        %387 = vmatprep.subr.bf16.mxu0 0
        %388 = vmatpush1.bf16.msra.mxu0 0
        %389 = vmatprep.subr.bf16.mxu0 0
        %390 = vmatpush1.bf16.msra.mxu0 0
        %391 = vmatprep.subr.bf16.mxu0 0
        %392 = vmatpush1.bf16.msra.mxu0 0
        %393 = vmatprep.subr.bf16.mxu0 0
        %394 = vmatpush1.bf16.msra.mxu0 0
        %395 = vmatprep.mubr.bf16.mxu0 0
        %396 = vmatmul.mubr.bf16.gmra.mrb[0].mxu0 %v355
        %v397 = vpop.f32.mrb[0].mxu0
        %v398 = vadd.f32 0.0, %v397
        %v399 = vpop.f32.mrb[0].mxu0
        %v400 = vadd.f32 0.0, %v399
        %v401 = vpop.f32.mrb[0].mxu0
        %v402 = vadd.f32 0.0, %v401
        %v403 = vpop.f32.mrb[0].mxu0
        %v404 = vadd.f32 0.0, %v403
        %405 = vdwg.mxu0
        %v408 = vunpack.c.l.s4 1983009808
        %v409 = vunpack.c.0.s8 %v408
        %v410 = vlaneseq
        %v411 = vshrl.u32 %v410, 7
        %v412 = vsub.s32 %v409, %v411
        %v413 = vrot.slane %v336, %v412
        %v414 = vcombine.high %v413, %v413
        %v415 = vsel %vm353, %v335, 0
        %v418 = vsel %vm332, %v413, 0
        %v421 = vsel %vm332, %v414, 0
        %423 = vmatprep.subr.bf16.mxu0 %v421
        %424 = vmatpush1.bf16.msra.mxu0 %v418
        %425 = vmatprep.subr.bf16.mxu0 0
        %426 = vmatpush1.bf16.msra.mxu0 0
        %427 = vmatprep.subr.bf16.mxu0 0
        %428 = vmatpush1.bf16.msra.mxu0 0
        %429 = vmatprep.subr.bf16.mxu0 0
        %430 = vmatpush1.bf16.msra.mxu0 0
        %431 = vmatprep.subr.bf16.mxu0 0
        %432 = vmatpush1.bf16.msra.mxu0 0
        %433 = vmatprep.subr.bf16.mxu0 0
        %434 = vmatpush1.bf16.msra.mxu0 0
        %435 = vmatprep.subr.bf16.mxu0 0
        %436 = vmatpush1.bf16.msra.mxu0 0
        %437 = vmatprep.subr.bf16.mxu0 0
        %438 = vmatpush1.bf16.msra.mxu0 0
        %439 = vmatprep.subr.bf16.mxu0 0
        %440 = vmatpush1.bf16.msra.mxu0 0
        %441 = vmatprep.subr.bf16.mxu0 0
        %442 = vmatpush1.bf16.msra.mxu0 0
        %443 = vmatprep.subr.bf16.mxu0 0
        %444 = vmatpush1.bf16.msra.mxu0 0
        %445 = vmatprep.subr.bf16.mxu0 0
        %446 = vmatpush1.bf16.msra.mxu0 0
        %447 = vmatprep.subr.bf16.mxu0 0
        %448 = vmatpush1.bf16.msra.mxu0 0
        %449 = vmatprep.subr.bf16.mxu0 0
        %450 = vmatpush1.bf16.msra.mxu0 0
        %451 = vmatprep.subr.bf16.mxu0 0
        %452 = vmatpush1.bf16.msra.mxu0 0
        %453 = vmatprep.subr.bf16.mxu0 0
        %454 = vmatpush1.bf16.msra.mxu0 0
        %455 = vmatprep.mubr.bf16.mxu0 0
        %456 = vmatmul.mubr.bf16.gmra.mrb[0].mxu0 %v415
        %v457 = vpop.f32.mrb[0].mxu0
        %v458 = vadd.f32 %v398, %v457
        %v459 = vpop.f32.mrb[0].mxu0
        %v460 = vadd.f32 %v400, %v459
        %v461 = vpop.f32.mrb[0].mxu0
        %v462 = vadd.f32 %v402, %v461
        %v463 = vpop.f32.mrb[0].mxu0
        %v464 = vadd.f32 %v404, %v463
        %465 = vdwg.mxu0
        %s466 = scalar_lea.vmem [#allocation7], 8
        %v467 = vld [vmem:[%s466] sm:$0xf]
        %vm468 = vcmask 1045504
        %v469 = vrot.slane %v335, 2
        %v470 = vrot.slane %v330, 2
        %v471 = vsel %vm468, %v469, %v470
        %v474 = vunpack.c.l.s4 1983009808
        %v475 = vunpack.c.0.s8 %v474
        %v476 = vlaneseq
        %v477 = vshrl.u32 %v476, 7
        %v478 = vsub.s32 %v475, %v477
        %v479 = vrot.slane %v467, %v478
        %v480 = vcombine.high %v479, %v479
        %v482 = vsel %vm353, %v471, 0
        %v485 = vsel %vm332, %v479, 0
        %v488 = vsel %vm332, %v480, 0
        %490 = vmatprep.subr.bf16.mxu0 %v488
        %491 = vmatpush1.bf16.msra.mxu0 %v485
        %492 = vmatprep.subr.bf16.mxu0 0
        %493 = vmatpush1.bf16.msra.mxu0 0
        %494 = vmatprep.subr.bf16.mxu0 0
        %495 = vmatpush1.bf16.msra.mxu0 0
        %496 = vmatprep.subr.bf16.mxu0 0
        %497 = vmatpush1.bf16.msra.mxu0 0
        %498 = vmatprep.subr.bf16.mxu0 0
        %499 = vmatpush1.bf16.msra.mxu0 0
        %500 = vmatprep.subr.bf16.mxu0 0
        %501 = vmatpush1.bf16.msra.mxu0 0
        %502 = vmatprep.subr.bf16.mxu0 0
        %503 = vmatpush1.bf16.msra.mxu0 0
        %504 = vmatprep.subr.bf16.mxu0 0
        %505 = vmatpush1.bf16.msra.mxu0 0
        %506 = vmatprep.subr.bf16.mxu0 0
        %507 = vmatpush1.bf16.msra.mxu0 0
        %508 = vmatprep.subr.bf16.mxu0 0
        %509 = vmatpush1.bf16.msra.mxu0 0
        %510 = vmatprep.subr.bf16.mxu0 0
        %511 = vmatpush1.bf16.msra.mxu0 0
        %512 = vmatprep.subr.bf16.mxu0 0
        %513 = vmatpush1.bf16.msra.mxu0 0
        %514 = vmatprep.subr.bf16.mxu0 0
        %515 = vmatpush1.bf16.msra.mxu0 0
        %516 = vmatprep.subr.bf16.mxu0 0
        %517 = vmatpush1.bf16.msra.mxu0 0
        %518 = vmatprep.subr.bf16.mxu0 0
        %519 = vmatpush1.bf16.msra.mxu0 0
        %520 = vmatprep.subr.bf16.mxu0 0
        %521 = vmatpush1.bf16.msra.mxu0 0
        %522 = vmatprep.mubr.bf16.mxu0 0
        %523 = vmatmul.mubr.bf16.gmra.mrb[0].mxu0 %v482
        %v524 = vpop.f32.mrb[0].mxu0
        %v525 = vadd.f32 0.0, %v524
        %v526 = vpop.f32.mrb[0].mxu0
        %v527 = vadd.f32 0.0, %v526
        %v528 = vpop.f32.mrb[0].mxu0
        %v529 = vadd.f32 0.0, %v528
        %v530 = vpop.f32.mrb[0].mxu0
        %v531 = vadd.f32 0.0, %v530
        %532 = vdwg.mxu0
        %v533 = vadd.f32 %v458, %v525
        %v534 = vadd.f32 %v460, %v527
        %v535 = vadd.f32 %v462, %v529
        %v536 = vadd.f32 %v464, %v531
        %v537 = vld [vmem:[#allocation9] sm:$0x3]
        %v539 = vlaneseq
        %v540 = vshrl.u32 %v539, 7
        %v541 = vsub.s32 0, %v540
        %v542 = vrot.slane %v537, %v541
        %v543 = vlaneseq
        %v544 = vshrl.u32 %v543, 7
        %v545 = vsub.s32 1, %v544
        %v546 = vrot.slane %v537, %v545
        %v549 = vadd.f32 %v533, %v542
        %v550 = vadd.f32 %v534, %v546
        %v551 = vadd.f32 %v535, %v542
        %v552 = vadd.f32 %v536, %v546
        %v553 = vmax.f32 %v549, 0.0
        %v554 = vmax.f32 %v551, 0.0
        %v555 = vpack.c.bf16 %v554, %v553
        %v556 = vld [vmem:[#allocation3] sm:$0x3]
        %v558 = vrot.slane %v555, 6
        %v562 = vsel %vm332, %v556, %v558
        %v564 = vld [vmem:[#allocation10] sm:$0xf]
        %v565 = vld [vmem:[#allocation10 + $0x4] sm:$0xf]
        %v566 = vld [vmem:[#allocation10 + $0x8] sm:$0xf]
        %v567 = vld [vmem:[#allocation10 + $0xc] sm:$0xf]
        %v568 = vld [vmem:[#allocation10 + $0x10] sm:$0xf]
        %v569 = vld [vmem:[#allocation10 + $0x14] sm:$0xf]
        %v570 = vld [vmem:[#allocation10 + $0x18] sm:$0xf]
        %v571 = vld [vmem:[#allocation10 + $0x1c] sm:$0xf]
        %v572 = vld [vmem:[#allocation10 + $0x20] sm:$0xf]
        %v573 = vld [vmem:[#allocation10 + $0x24] sm:$0xf]
        %v574 = vld [vmem:[#allocation10 + $0x28] sm:$0xf]
        %v575 = vld [vmem:[#allocation10 + $0x2c] sm:$0xf]
        %v576 = vld [vmem:[#allocation10 + $0x30] sm:$0xf]
        %v577 = vld [vmem:[#allocation10 + $0x34] sm:$0xf]
        %v578 = vld [vmem:[#allocation10 + $0x38] sm:$0xf]
        %v579 = vld [vmem:[#allocation10 + $0x3c] sm:$0xf]
        %s580 = scalar_lea.vmem [#allocation10], 64
        %v581 = vld [vmem:[%s580] sm:$0xf]
        %v582 = vld [vmem:[%s580 + $0x4] sm:$0xf]
        %v583 = vld [vmem:[%s580 + $0x8] sm:$0xf]
        %v584 = vld [vmem:[%s580 + $0xc] sm:$0xf]
        %v585 = vld [vmem:[%s580 + $0x10] sm:$0xf]
        %v586 = vld [vmem:[%s580 + $0x14] sm:$0xf]
        %v587 = vld [vmem:[%s580 + $0x18] sm:$0xf]
        %v588 = vld [vmem:[%s580 + $0x1c] sm:$0xf]
        %v589 = vld [vmem:[%s580 + $0x20] sm:$0xf]
        %v590 = vld [vmem:[%s580 + $0x24] sm:$0xf]
        %v591 = vld [vmem:[%s580 + $0x28] sm:$0xf]
        %v592 = vld [vmem:[%s580 + $0x2c] sm:$0xf]
        %v593 = vld [vmem:[%s580 + $0x30] sm:$0xf]
        %v594 = vld [vmem:[%s580 + $0x34] sm:$0xf]
        %v595 = vld [vmem:[%s580 + $0x38] sm:$0xf]
        %v596 = vld [vmem:[%s580 + $0x3c] sm:$0xf]
        %v598 = vrot.slane %v562, 1
        %v599 = vrot.slane %v558, 1
        %v600 = vsel %vm340, %v598, %v599
        %v618 = vunpack.c.l.b16 %v581
        %v619 = vunpack.c.l.b16 %v582
        %v620 = vunpack.c.l.b16 %v583
        %v621 = vunpack.c.l.b16 %v584
        %v622 = vunpack.c.l.b16 %v585
        %v623 = vunpack.c.l.b16 %v586
        %v624 = vunpack.c.l.b16 %v587
        %v625 = vunpack.c.l.b16 %v588
        %v626 = vunpack.c.l.b16 %v589
        %v627 = vunpack.c.l.b16 %v590
        %v628 = vunpack.c.l.b16 %v591
        %v629 = vunpack.c.l.b16 %v592
        %v630 = vunpack.c.l.b16 %v593
        %v631 = vunpack.c.l.b16 %v594
        %v632 = vunpack.c.l.b16 %v595
        %v633 = vunpack.c.l.b16 %v596
        %v634 = vpack.c.b16 %v619, %v618
        %v635 = vpack.c.b16 %v621, %v620
        %v636 = vpack.c.b16 %v623, %v622
        %v637 = vpack.c.b16 %v625, %v624
        %v638 = vpack.c.b16 %v627, %v626
        %v639 = vpack.c.b16 %v629, %v628
        %v640 = vpack.c.b16 %v631, %v630
        %v641 = vpack.c.b16 %v633, %v632
        %650 = vmatprep.subr.bf16.mxu0 0
        %651 = vmatpush1.bf16.msra.mxu0 %v634
        %652 = vmatprep.subr.bf16.mxu0 0
        %653 = vmatpush1.bf16.msra.mxu0 %v635
        %654 = vmatprep.subr.bf16.mxu0 0
        %655 = vmatpush1.bf16.msra.mxu0 %v636
        %656 = vmatprep.subr.bf16.mxu0 0
        %657 = vmatpush1.bf16.msra.mxu0 %v637
        %658 = vmatprep.subr.bf16.mxu0 0
        %659 = vmatpush1.bf16.msra.mxu0 %v638
        %660 = vmatprep.subr.bf16.mxu0 0
        %661 = vmatpush1.bf16.msra.mxu0 %v639
        %662 = vmatprep.subr.bf16.mxu0 0
        %663 = vmatpush1.bf16.msra.mxu0 %v640
        %664 = vmatprep.subr.bf16.mxu0 0
        %665 = vmatpush1.bf16.msra.mxu0 %v641
        %666 = vmatprep.subr.bf16.mxu0 0
        %667 = vmatpush1.bf16.msra.mxu0 0
        %668 = vmatprep.subr.bf16.mxu0 0
        %669 = vmatpush1.bf16.msra.mxu0 0
        %670 = vmatprep.subr.bf16.mxu0 0
        %671 = vmatpush1.bf16.msra.mxu0 0
        %672 = vmatprep.subr.bf16.mxu0 0
        %673 = vmatpush1.bf16.msra.mxu0 0
        %674 = vmatprep.subr.bf16.mxu0 0
        %675 = vmatpush1.bf16.msra.mxu0 0
        %676 = vmatprep.subr.bf16.mxu0 0
        %677 = vmatpush1.bf16.msra.mxu0 0
        %678 = vmatprep.subr.bf16.mxu0 0
        %679 = vmatpush1.bf16.msra.mxu0 0
        %680 = vmatprep.subr.bf16.mxu0 0
        %681 = vmatpush1.bf16.msra.mxu0 0
        %682 = vmatprep.mubr.bf16.mxu0 0
        %683 = vmatmul.mubr.bf16.gmra.mrb[0].mxu0 %v600
        %v684 = vpop.f32.mrb[0].mxu0
        %v685 = vadd.f32 0.0, %v684
        %v686 = vpop.f32.mrb[0].mxu0
        %v687 = vpop.f32.mrb[0].mxu0
        %v688 = vadd.f32 0.0, %v687
        %v689 = vpop.f32.mrb[0].mxu0
        %690 = vdwg.mxu0
        %v707 = vunpack.c.l.b16 %v564
        %v708 = vunpack.c.l.b16 %v565
        %v709 = vunpack.c.l.b16 %v566
        %v710 = vunpack.c.l.b16 %v567
        %v711 = vunpack.c.l.b16 %v568
        %v712 = vunpack.c.l.b16 %v569
        %v713 = vunpack.c.l.b16 %v570
        %v714 = vunpack.c.l.b16 %v571
        %v715 = vunpack.c.l.b16 %v572
        %v716 = vunpack.c.l.b16 %v573
        %v717 = vunpack.c.l.b16 %v574
        %v718 = vunpack.c.l.b16 %v575
        %v719 = vunpack.c.l.b16 %v576
        %v720 = vunpack.c.l.b16 %v577
        %v721 = vunpack.c.l.b16 %v578
        %v722 = vunpack.c.l.b16 %v579
        %v723 = vpack.c.b16 %v708, %v707
        %v724 = vpack.c.b16 %v710, %v709
        %v725 = vpack.c.b16 %v712, %v711
        %v726 = vpack.c.b16 %v714, %v713
        %v727 = vpack.c.b16 %v716, %v715
        %v728 = vpack.c.b16 %v718, %v717
        %v729 = vpack.c.b16 %v720, %v719
        %v730 = vpack.c.b16 %v722, %v721
        %739 = vmatprep.subr.bf16.mxu0 0
        %740 = vmatpush1.bf16.msra.mxu0 %v723
        %741 = vmatprep.subr.bf16.mxu0 0
        %742 = vmatpush1.bf16.msra.mxu0 %v724
        %743 = vmatprep.subr.bf16.mxu0 0
        %744 = vmatpush1.bf16.msra.mxu0 %v725
        %745 = vmatprep.subr.bf16.mxu0 0
        %746 = vmatpush1.bf16.msra.mxu0 %v726
        %747 = vmatprep.subr.bf16.mxu0 0
        %748 = vmatpush1.bf16.msra.mxu0 %v727
        %749 = vmatprep.subr.bf16.mxu0 0
        %750 = vmatpush1.bf16.msra.mxu0 %v728
        %751 = vmatprep.subr.bf16.mxu0 0
        %752 = vmatpush1.bf16.msra.mxu0 %v729
        %753 = vmatprep.subr.bf16.mxu0 0
        %754 = vmatpush1.bf16.msra.mxu0 %v730
        %755 = vmatprep.subr.bf16.mxu0 0
        %756 = vmatpush1.bf16.msra.mxu0 0
        %757 = vmatprep.subr.bf16.mxu0 0
        %758 = vmatpush1.bf16.msra.mxu0 0
        %759 = vmatprep.subr.bf16.mxu0 0
        %760 = vmatpush1.bf16.msra.mxu0 0
        %761 = vmatprep.subr.bf16.mxu0 0
        %762 = vmatpush1.bf16.msra.mxu0 0
        %763 = vmatprep.subr.bf16.mxu0 0
        %764 = vmatpush1.bf16.msra.mxu0 0
        %765 = vmatprep.subr.bf16.mxu0 0
        %766 = vmatpush1.bf16.msra.mxu0 0
        %767 = vmatprep.subr.bf16.mxu0 0
        %768 = vmatpush1.bf16.msra.mxu0 0
        %769 = vmatprep.subr.bf16.mxu0 0
        %770 = vmatpush1.bf16.msra.mxu0 0
        %771 = vmatprep.mubr.bf16.mxu0 0
        %772 = vmatmul.mubr.bf16.gmra.mrb[0].mxu0 %v562
        %v773 = vpop.f32.mrb[0].mxu0
        %v774 = vadd.f32 %v685, %v773
        %v775 = vpop.f32.mrb[0].mxu0
        %v776 = vpop.f32.mrb[0].mxu0
        %v777 = vadd.f32 %v688, %v776
        %v778 = vpop.f32.mrb[0].mxu0
        %779 = vdwg.mxu0
        %s780 = scalar_lea.vmem [#allocation10], 128
        %v781 = vld [vmem:[%s780] sm:$0xf]
        %v782 = vld [vmem:[%s780 + $0x4] sm:$0xf]
        %v783 = vld [vmem:[%s780 + $0x8] sm:$0xf]
        %v784 = vld [vmem:[%s780 + $0xc] sm:$0xf]
        %v785 = vld [vmem:[%s780 + $0x10] sm:$0xf]
        %v786 = vld [vmem:[%s780 + $0x14] sm:$0xf]
        %v787 = vld [vmem:[%s780 + $0x18] sm:$0xf]
        %v788 = vld [vmem:[%s780 + $0x1c] sm:$0xf]
        %v789 = vld [vmem:[%s780 + $0x20] sm:$0xf]
        %v790 = vld [vmem:[%s780 + $0x24] sm:$0xf]
        %v791 = vld [vmem:[%s780 + $0x28] sm:$0xf]
        %v792 = vld [vmem:[%s780 + $0x2c] sm:$0xf]
        %v793 = vld [vmem:[%s780 + $0x30] sm:$0xf]
        %v794 = vld [vmem:[%s780 + $0x34] sm:$0xf]
        %v795 = vld [vmem:[%s780 + $0x38] sm:$0xf]
        %v796 = vld [vmem:[%s780 + $0x3c] sm:$0xf]
        %v797 = vrot.slane %v562, 2
        %v798 = vrot.slane %v558, 2
        %v799 = vsel %vm468, %v797, %v798
        %v817 = vunpack.c.l.b16 %v781
        %v818 = vunpack.c.l.b16 %v782
        %v819 = vunpack.c.l.b16 %v783
        %v820 = vunpack.c.l.b16 %v784
        %v821 = vunpack.c.l.b16 %v785
        %v822 = vunpack.c.l.b16 %v786
        %v823 = vunpack.c.l.b16 %v787
        %v824 = vunpack.c.l.b16 %v788
        %v825 = vunpack.c.l.b16 %v789
        %v826 = vunpack.c.l.b16 %v790
        %v827 = vunpack.c.l.b16 %v791
        %v828 = vunpack.c.l.b16 %v792
        %v829 = vunpack.c.l.b16 %v793
        %v830 = vunpack.c.l.b16 %v794
        %v831 = vunpack.c.l.b16 %v795
        %v832 = vunpack.c.l.b16 %v796
        %v833 = vpack.c.b16 %v818, %v817
        %v834 = vpack.c.b16 %v820, %v819
        %v835 = vpack.c.b16 %v822, %v821
        %v836 = vpack.c.b16 %v824, %v823
        %v837 = vpack.c.b16 %v826, %v825
        %v838 = vpack.c.b16 %v828, %v827
        %v839 = vpack.c.b16 %v830, %v829
        %v840 = vpack.c.b16 %v832, %v831
        %849 = vmatprep.subr.bf16.mxu0 0
        %850 = vmatpush1.bf16.msra.mxu0 %v833
        %851 = vmatprep.subr.bf16.mxu0 0
        %852 = vmatpush1.bf16.msra.mxu0 %v834
        %853 = vmatprep.subr.bf16.mxu0 0
        %854 = vmatpush1.bf16.msra.mxu0 %v835
        %855 = vmatprep.subr.bf16.mxu0 0
        %856 = vmatpush1.bf16.msra.mxu0 %v836
        %857 = vmatprep.subr.bf16.mxu0 0
        %858 = vmatpush1.bf16.msra.mxu0 %v837
        %859 = vmatprep.subr.bf16.mxu0 0
        %860 = vmatpush1.bf16.msra.mxu0 %v838
        %861 = vmatprep.subr.bf16.mxu0 0
        %862 = vmatpush1.bf16.msra.mxu0 %v839
        %863 = vmatprep.subr.bf16.mxu0 0
        %864 = vmatpush1.bf16.msra.mxu0 %v840
        %865 = vmatprep.subr.bf16.mxu0 0
        %866 = vmatpush1.bf16.msra.mxu0 0
        %867 = vmatprep.subr.bf16.mxu0 0
        %868 = vmatpush1.bf16.msra.mxu0 0
        %869 = vmatprep.subr.bf16.mxu0 0
        %870 = vmatpush1.bf16.msra.mxu0 0
        %871 = vmatprep.subr.bf16.mxu0 0
        %872 = vmatpush1.bf16.msra.mxu0 0
        %873 = vmatprep.subr.bf16.mxu0 0
        %874 = vmatpush1.bf16.msra.mxu0 0
        %875 = vmatprep.subr.bf16.mxu0 0
        %876 = vmatpush1.bf16.msra.mxu0 0
        %877 = vmatprep.subr.bf16.mxu0 0
        %878 = vmatpush1.bf16.msra.mxu0 0
        %879 = vmatprep.subr.bf16.mxu0 0
        %880 = vmatpush1.bf16.msra.mxu0 0
        %881 = vmatprep.mubr.bf16.mxu0 0
        %882 = vmatmul.mubr.bf16.gmra.mrb[0].mxu0 %v799
        %v883 = vpop.f32.mrb[0].mxu0
        %v884 = vadd.f32 0.0, %v883
        %v885 = vpop.f32.mrb[0].mxu0
        %v886 = vpop.f32.mrb[0].mxu0
        %v887 = vadd.f32 0.0, %v886
        %v888 = vpop.f32.mrb[0].mxu0
        %889 = vdwg.mxu0
        %v890 = vadd.f32 %v774, %v884
        %v891 = vadd.f32 %v777, %v887
        %v892 = vld [vmem:[#allocation12] sm:$0x1]
        %v894 = vlaneseq
        %v895 = vshrl.u32 %v894, 7
        %v896 = vsub.s32 0, %v895
        %v897 = vrot.slane %v892, %v896
        %v899 = vadd.f32 %v890, %v897
        %v900 = vadd.f32 %v891, %v897
        %v901 = vmax.f32 %v899, 0.0
        %v902 = vmax.f32 %v900, 0.0
        %v903 = vadd.f32 %v901, %v550
        %v904 = vadd.f32 %v902, %v552
        %v905 = vmax.f32 %v903, 0.0
        %v906 = vmax.f32 %v904, 0.0
        %vm907 = vcmask 64512
        %908 = vst.msk [vmem:[%s314] sm:$0xff] %vm907, %v905
        %909 = vst.msk [vmem:[%s314 + $0x8] sm:$0xff] %vm907, %v906
        %vm910 = vcmask 25600
        %911 = vst.msk [vmem:[#allocation2] sm:$0x3] %vm910, %v330
        %912 = vst [vmem:[#allocation3] sm:$0x3] %v558
        %s913 = sand.u32 %s158, 1
        %s914 = scalar_lea.sflag [#allocation6], %s913
        %s915 = sand.u32 %s158, 1
        %s916 = smul.addr %s915, 16
        %s917 = scalar_lea.vmem [#allocation13], %s916
        // Predicated region
        $region65: #{temporal_block_pallas.1} parent=39 // pred_check
          %p918 = pneg %p168
        $region66: #{temporal_block_pallas.1} parent=39 // pred_check_branch
          %920 = sbr.rel (%p918) target = $region68
        $region67: #{temporal_block_pallas.1} parent=39 // pred_region
          %s921 = smul.u32 2, %s29
          %s923 = ssub.s32 256, 256
          %924 = vsyncadd %s914, %s923
          %s925 = smul.addr %s28, 2
          %s926 = sadd.s32 %s921, %s925
          %s927 = smul.addr %s926, 128
          %s928 = scalar_lea.hbm %s5, %s927
          %s929 = sshll.u32 %s917, 4
          %s930 = int_to_ptr.vmem [resolvable:$true] %s929
          %935 = dma.vmem_to_hbm [thread:$0]  %s930, 256, %s928, %s914, 128, 128, 8
        $region68: #{temporal_block_pallas.1} parent=39 // pred_fallthru
          _
      $region40: #{temporal_block_pallas.1} parent=5 // pred_fallthru
        _
      %p936 = scmp.le.s32.totalorder 2, %s19
      // Predicated region
      $region69: #{temporal_block_pallas.1} parent=5 // pred_check
        %p937 = pneg %p936
      $region70: #{temporal_block_pallas.1} parent=5 // pred_check_branch
        %939 = sbr.rel (%p937) target = $region72
      $region71: #{temporal_block_pallas.1} parent=5 // pred_region
        %s940 = ssub.s32 %s19, 2
        // Predicated region
        $region73: #{temporal_block_pallas.1} parent=71 // pred_check
          %p941 = pneg %p174
        $region74: #{temporal_block_pallas.1} parent=71 // pred_check_branch
          %943 = sbr.rel (%p941) target = $region76
        $region75: #{temporal_block_pallas.1} parent=71 // pred_region
          %s944 = sand.u32 %s159, 1
          %s945 = scalar_lea.sflag [#allocation6], %s944
          %s946 = sand.u32 %s159, 1
          %s947 = smul.addr %s946, 16
          %s948 = scalar_lea.vmem [#allocation13], %s947
          %949 = dma.done %s945, 256
        $region76: #{temporal_block_pallas.1} parent=71 // pred_fallthru
          _
      $region72: #{temporal_block_pallas.1} parent=5 // pred_fallthru
        _
    $region6: #{temporal_block_pallas.1} parent=1 // loop_footer
      %s23 = sadd.s32 1, %s19
    $region7: #{temporal_block_pallas.1} parent=1 // loop_footer_branch
      %18 = sbr.rel target = $region3
    $region8: #{temporal_block_pallas.1} parent=1 // loop_exit
      _
    %950 = vsyncpa [#allocation5], 1
    %s951 = scalar_lea.sflag [#allocation5], 1
    %952 = vsyncpa %s951, 1
    %953 = vsyncpa [#allocation8], 1
    %954 = vsyncpa [#allocation11], 1
    %955 = vsyncpa [#allocation6], 1
    %s956 = scalar_lea.sflag [#allocation6], 1
    %957 = vsyncpa %s956, 1

</llo_original>
